<compile_context>
chip_gen: v5e
topology: v5e:2x2
jax: 0.10.0
libtpu: 0.0.40
codegen_flags: <defaults>
</compile_context>

<pallas_src>
import jax
import jax.numpy as jnp
from jax.experimental import pallas as pl
from jax.experimental.pallas import tpu as pltpu


TILE_N_MAX = 2048      # rows per grid step (multiple of 16 for bf16 sublanes)
LANE = 128             # lane width: logits padded to a lane-dense slab
SMALL_N_JNP = 256      # below this many rows, plain jnp beats kernel overhead


def _round_up(x, m):
    return (x + m - 1) // m * m


def _prediction_head_kernel(x_ref, w1_ref, b1_ref, w2_ref, b2_ref, o_ref):
    # x tile arrives in the caller's dtype; cast to bf16 to feed the MXU.
    x = x_ref[...].astype(jnp.bfloat16)                          # (TILE_N, E)
    # pooler: Linear(E -> E), bf16 operands, f32 accumulation.
    h = jnp.dot(x, w1_ref[...], preferred_element_type=jnp.float32)
    h = h + b1_ref[...]                                          # f32 bias
    h = jnp.tanh(h)                                              # EUP, f32
    # origchannel_logits: Linear(E -> c_pad); padded columns are exactly zero.
    out = jnp.dot(h.astype(jnp.bfloat16), w2_ref[...],
                  preferred_element_type=jnp.float32)
    out = out + b2_ref[...]                                      # f32 bias
    o_ref[...] = out.astype(o_ref.dtype)                         # bf16 lane-dense slab


def prediction_head(embedded_states, w_pool, b_pool, w_logits, b_logits,
                    *, tile_n=None, use_pallas=None):
    """embedded_states: (..., E);  w_pool: (E, E);  w_logits: (E, classes).

    Weight matrices are in (in, out) layout (i.e. torch weight.T).
    """
    *lead, E = embedded_states.shape
    classes = w_logits.shape[1]
    in_dtype = embedded_states.dtype

    x2d = embedded_states.reshape(-1, E)
    n = x2d.shape[0]
    if n == 0:
        return jnp.zeros((*lead, classes), dtype=in_dtype)

    # --- small-n fast path: pallas_call fixed overhead dominates tiny inputs ---
    if use_pallas is None:
        use_pallas = n >= SMALL_N_JNP
    if not use_pallas:
        out = jnp.tanh(x2d @ w_pool + b_pool) @ w_logits + b_logits
        return out.astype(in_dtype).reshape(*lead, classes)

    # --- lane-dense output: pad classes to a 128-wide slab with zero cols ---
    c_pad = _round_up(classes, LANE)
    w2 = w_logits
    b2 = b_logits
    if c_pad != classes:
        w2 = jnp.pad(w2, ((0, 0), (0, c_pad - classes)))
        b2 = jnp.pad(b2, (0, c_pad - classes))

    # bf16 weights for the bf16-native MXU (tiny arrays, negligible cast cost);
    # biases stay f32 and are added to the f32 accumulator.
    w1 = w_pool.astype(jnp.bfloat16)
    w2 = w2.astype(jnp.bfloat16)
    b1 = b_pool.astype(jnp.float32).reshape(1, E)
    b2 = b2.astype(jnp.float32).reshape(1, c_pad)

    # --- row tiling: multiple of 16 sublanes, big tiles, >=2 steps when possible
    if tile_n is None:
        tile_n = max(16, min(TILE_N_MAX, _round_up(pl.cdiv(n, 2), 16)))
    grid = (pl.cdiv(n, tile_n),)   # ragged last block handled by masked stores

    flops = 2 * n * E * E + 2 * n * E * c_pad
    bytes_accessed = (x2d.nbytes + w1.nbytes + w2.nbytes + b1.nbytes + b2.nbytes
                      + n * c_pad * 2)
    cost = pl.CostEstimate(flops=flops, transcendentals=n * E,
                           bytes_accessed=bytes_accessed)

    out2d = pl.pallas_call(
        _prediction_head_kernel,
        # bf16 output halves the dominant (128-wide padded) HBM write stream.
        out_shape=jax.ShapeDtypeStruct((n, c_pad), jnp.bfloat16),
        grid_spec=pltpu.PrefetchScalarGridSpec(
            num_scalar_prefetch=0,
            grid=grid,
            in_specs=[
                # x: tiled over rows -> pipelined, double-buffered DMA.
                pl.BlockSpec((tile_n, E), lambda i: (i, 0)),
                # weights / biases: whole-array, constant index_map -> VMEM-resident.
                pl.BlockSpec((E, E), lambda i: (0, 0)),
                pl.BlockSpec((1, E), lambda i: (0, 0)),
                pl.BlockSpec((E, c_pad), lambda i: (0, 0)),
                pl.BlockSpec((1, c_pad), lambda i: (0, 0)),
            ],
            out_specs=pl.BlockSpec((tile_n, c_pad), lambda i: (i, 0)),
        ),
        compiler_params=pltpu.CompilerParams(
            dimension_semantics=("parallel",),   # v7x: shard rows across both TCs
            vmem_limit_bytes=32 * 1024 * 1024,   # > v5e's 16 MiB scoped default
        ),
        cost_estimate=cost,
    )(x2d, w1, b1, w2, b2)

    # Strip the padded logit columns and restore the caller's dtype / shape.
    out = out2d[:, :classes].astype(in_dtype)
    return out.reshape(*lead, classes)


if __name__ == "__main__":
    # Small shapes consistent with the module: embed_dim=32, classes=2.
    batch, seq, embed_dim, classes = 2, 8, 32, 2

    key = jax.random.PRNGKey(0)
    k_x, k_x2, k_w1, k_w2, k_b2 = jax.random.split(key, 5)

    # Deterministic parameters (torch Linear stores weight as (out, in);
    # these are the already-transposed (in, out) matrices used by the kernel).
    w_pool = jax.random.normal(k_w1, (embed_dim, embed_dim), dtype=jnp.float32) * 0.05
    b_pool = jnp.zeros((embed_dim,), dtype=jnp.float32)   # pooler.bias.zero_()
    w_logits = jax.random.normal(k_w2, (embed_dim, classes), dtype=jnp.float32) * 0.05
    b_logits = jax.random.normal(k_b2, (classes,), dtype=jnp.float32) * 0.05

    # --- 1) tiny spec shape, force the Pallas path so the kernel definitely runs
    x = jax.random.normal(k_x, (batch, seq, embed_dim), dtype=jnp.float32)
    out = prediction_head(x, w_pool, b_pool, w_logits, b_logits, use_pallas=True)
    out = jax.block_until_ready(out)
    ref = jnp.tanh(x @ w_pool + b_pool) @ w_logits + b_logits
    assert out.shape == (batch, seq, classes)
    assert jnp.allclose(out, ref, atol=2e-2, rtol=2e-2)   # bf16 MXU/output path

    # --- 2) larger case through default dispatch: 2-step grid + ragged last block
    b2_, s2_ = 4, 300                      # 1200 rows -> tile_n=608, grid=(2,)
    x_big = jax.random.normal(k_x2, (b2_, s2_, embed_dim), dtype=jnp.float32)
    out_big = prediction_head(x_big, w_pool, b_pool, w_logits, b_logits)
    out_big = jax.block_until_ready(out_big)
    ref_big = jnp.tanh(x_big @ w_pool + b_pool) @ w_logits + b_logits
    assert out_big.shape == (b2_, s2_, classes)
    assert jnp.allclose(out_big, ref_big, atol=2e-2, rtol=2e-2)

    print("KERNEL_OK")
</pallas_src>

<mosaic_0001>
module attributes {stable_mosaic.version = 11 : i64} {
  func.func @_prediction_head_kernel(%arg0: i32, %arg1: memref<16x32xf32, #tpu.memory_space<vmem>>, %arg2: memref<32x32xbf16, #tpu.memory_space<vmem>>, %arg3: memref<1x32xf32, #tpu.memory_space<vmem>>, %arg4: memref<32x128xbf16, #tpu.memory_space<vmem>>, %arg5: memref<1x128xf32, #tpu.memory_space<vmem>>, %arg6: memref<16x128xbf16, #tpu.memory_space<vmem>>) attributes {dimension_semantics = [#tpu.dimension_semantics<parallel>], iteration_bounds = array<i64: 1>, scalar_prefetch = 0 : i64, scratch_operands = 0 : i64, tpu.core_type = #tpu.core_type<tc>, window_params = [{transform_indices = @transform_0, window_bounds = array<i64: 16, 32>}, {pipeline_mode = #tpu.pipeline_mode<synchronous>, transform_indices = @transform_1, window_bounds = array<i64: 32, 32>}, {pipeline_mode = #tpu.pipeline_mode<synchronous>, transform_indices = @transform_2, window_bounds = array<i64: 1, 32>}, {pipeline_mode = #tpu.pipeline_mode<synchronous>, transform_indices = @transform_3, window_bounds = array<i64: 32, 128>}, {pipeline_mode = #tpu.pipeline_mode<synchronous>, transform_indices = @transform_4, window_bounds = array<i64: 1, 128>}, {transform_indices = @transform_5, window_bounds = array<i64: 16, 128>}]} {
    %c0 = arith.constant 0 : index
    %c0_0 = arith.constant 0 : index
    %0 = vector.load %arg1[%c0, %c0_0] : memref<16x32xf32, #tpu.memory_space<vmem>>, vector<16x32xf32>
    %1 = arith.truncf %0 : vector<16x32xf32> to vector<16x32xbf16>
    %c0_1 = arith.constant 0 : index
    %c0_2 = arith.constant 0 : index
    %2 = vector.load %arg2[%c0_1, %c0_2] : memref<32x32xbf16, #tpu.memory_space<vmem>>, vector<32x32xbf16>
    %cst = arith.constant dense<0.000000e+00> : vector<16x32xf32>
    %3 = tpu.matmul %1, %2, %cst {dimension_numbers = #tpu.dot_dimension_numbers<[1], [0], [0], [1], [0, 0, 1, 1], [], []>} : vector<16x32xbf16>, vector<32x32xbf16>, vector<16x32xf32> -> vector<16x32xf32>
    %c0_3 = arith.constant 0 : index
    %c0_4 = arith.constant 0 : index
    %4 = vector.load %arg3[%c0_3, %c0_4] : memref<1x32xf32, #tpu.memory_space<vmem>>, vector<1x32xf32>
    %5 = vector.broadcast %4 : vector<1x32xf32> to vector<16x32xf32>
    %6 = arith.addf %3, %5 : vector<16x32xf32>
    %7 = math.tanh %6 : vector<16x32xf32>
    %8 = arith.truncf %7 : vector<16x32xf32> to vector<16x32xbf16>
    %c0_5 = arith.constant 0 : index
    %c0_6 = arith.constant 0 : index
    %9 = vector.load %arg4[%c0_5, %c0_6] : memref<32x128xbf16, #tpu.memory_space<vmem>>, vector<32x128xbf16>
    %cst_7 = arith.constant dense<0.000000e+00> : vector<16x128xf32>
    %10 = tpu.matmul %8, %9, %cst_7 {dimension_numbers = #tpu.dot_dimension_numbers<[1], [0], [0], [1], [0, 0, 1, 1], [], []>} : vector<16x32xbf16>, vector<32x128xbf16>, vector<16x128xf32> -> vector<16x128xf32>
    %c0_8 = arith.constant 0 : index
    %c0_9 = arith.constant 0 : index
    %11 = vector.load %arg5[%c0_8, %c0_9] : memref<1x128xf32, #tpu.memory_space<vmem>>, vector<1x128xf32>
    %12 = vector.broadcast %11 : vector<1x128xf32> to vector<16x128xf32>
    %13 = arith.addf %10, %12 : vector<16x128xf32>
    %14 = arith.truncf %13 : vector<16x128xf32> to vector<16x128xbf16>
    %c0_10 = arith.constant 0 : index
    %c0_11 = arith.constant 0 : index
    %15 = vector.load %arg6[%c0_10, %c0_11] : memref<16x128xbf16, #tpu.memory_space<vmem>>, vector<16x128xbf16>
    tpu.vector_store %arg6[%c0_10, %c0_11], %14 {strides = array<i32>} : memref<16x128xbf16, #tpu.memory_space<vmem>>, vector<16x128xbf16>,
    return
  }
  func.func @transform_0(%arg0: i32) -> (i32, i32) {
    %c0_i32 = arith.constant 0 : i32
    %c0_i32_0 = arith.constant 0 : i32
    return %arg0, %c0_i32 : i32, i32
  }
  func.func @transform_1(%arg0: i32) -> (i32, i32) {
    %c0_i32 = arith.constant 0 : i32
    %c0_i32_0 = arith.constant 0 : i32
    %c0_i32_1 = arith.constant 0 : i32
    return %c0_i32, %c0_i32_0 : i32, i32
  }
  func.func @transform_2(%arg0: i32) -> (i32, i32) {
    %c0_i32 = arith.constant 0 : i32
    %c0_i32_0 = arith.constant 0 : i32
    %c0_i32_1 = arith.constant 0 : i32
    return %c0_i32, %c0_i32_0 : i32, i32
  }
  func.func @transform_3(%arg0: i32) -> (i32, i32) {
    %c0_i32 = arith.constant 0 : i32
    %c0_i32_0 = arith.constant 0 : i32
    %c0_i32_1 = arith.constant 0 : i32
    return %c0_i32, %c0_i32_0 : i32, i32
  }
  func.func @transform_4(%arg0: i32) -> (i32, i32) {
    %c0_i32 = arith.constant 0 : i32
    %c0_i32_0 = arith.constant 0 : i32
    %c0_i32_1 = arith.constant 0 : i32
    return %c0_i32, %c0_i32_0 : i32, i32
  }
  func.func @transform_5(%arg0: i32) -> (i32, i32) {
    %c0_i32 = arith.constant 0 : i32
    %c0_i32_0 = arith.constant 0 : i32
    return %arg0, %c0_i32 : i32, i32
  }
}

</mosaic_0001>

<llo_original>
// kernel: tpu_custom_call.1
$region0: #{tpu_custom_call.1}
  #allocation0 [shape = 'u32[]', space=smem, size = 0x4, offset = 0x4, fixed_abs, tag = 'smem constant byte address 0x4 - core index']
  #allocation1 [shape = 'u32[72,128]{1,0:T(1,128)}', space=vmem, size = 0x9000, scoped, tag = 'internal scratch']
  %s0 = inlined_call_operand.hbm [shape: f32[16,32], index: 0, kind: input, shape index: {}]
  %s1 = inlined_call_operand.hbm [shape: bf16[32,32], index: 1, kind: input, shape index: {}]
  %s2 = inlined_call_operand.vmem [shape: f32[1,32], index: 2, kind: input, shape index: {}]
  %s3 = inlined_call_operand.hbm [shape: bf16[32,128], index: 3, kind: input, shape index: {}]
  %s4 = inlined_call_operand.vmem [shape: f32[1,128], index: 4, kind: input, shape index: {}]
  %s5 = inlined_call_operand.hbm [shape: bf16[16,128], index: 5, kind: output, shape index: {}]
  %s6 = sld [smem:[#allocation0]]
  $region42: #{tpu_custom_call.1} parent=0
    _
  %s8 = ssub.s32 1, %s6
  %s9 = scalar_select 0, %s8, %s6
  $region1: #{tpu_custom_call.1} parent=0
    #allocation2 [shape = 'u8[8192]{0}', space=vmem, size = 0x2000, scoped, tag = 'input window, operand 0, single buffered']
    #allocation3 [shape = 's32[1]{0}', space=sflag, size = 0x4, scoped, tag = 'scoped memory for tpu_custom_call.1']
    #allocation4 [shape = 's32[1]{0}', space=sflag, size = 0x4, scoped, tag = 'scoped memory for tpu_custom_call.1']
    #allocation5 [shape = 'u8[8192]{0}', space=vmem, size = 0x2000, scoped, tag = 'input window, operand 1, single buffered']
    #allocation6 [shape = 's32[1]{0}', space=sflag, size = 0x4, scoped, tag = 'scoped memory for tpu_custom_call.1']
    #allocation7 [shape = 'u8[8192]{0}', space=vmem, size = 0x2000, scoped, tag = 'input window, operand 3, single buffered']
    #allocation8 [shape = 'u8[4096]{0}', space=vmem, size = 0x1000, scoped, tag = 'output window, operand 0, single buffered']
    %10 = vsyncpa [#allocation3], 0
    %11 = vsyncpa [#allocation6], 0
    %12 = vsyncpa [#allocation4], 0
    // Predicated region
    $region2: #{tpu_custom_call.1} parent=1 // pred_check
      _
    $region3: #{tpu_custom_call.1} parent=1 // pred_check_branch
      %14 = sbr.rel (0) target = $region5
    $region4: #{tpu_custom_call.1} parent=1 // pred_region
      %16 = vsyncadd [#allocation3], 0
      %s17 = sshll.u32 %s0, 4
      %s18 = int_to_ptr.hbm [resolvable:$true] %s17
      %s19 = sshll.u32 [#allocation2], 4
      %s20 = int_to_ptr.vmem [resolvable:$true] %s19
      %25 = dma.hbm_to_vmem [thread:$0]  %s18, 256, %s20, [#allocation3], 128, 128, 8
    $region5: #{tpu_custom_call.1} parent=1 // pred_fallthru
      _
    // Predicated region
    $region6: #{tpu_custom_call.1} parent=1 // pred_check
      _
    $region7: #{tpu_custom_call.1} parent=1 // pred_check_branch
      %27 = sbr.rel (0) target = $region9
    $region8: #{tpu_custom_call.1} parent=1 // pred_region
      %29 = vsyncadd [#allocation6], 0
      %s30 = sshll.u32 %s1, 4
      %s31 = int_to_ptr.hbm [resolvable:$true] %s30
      %s32 = sshll.u32 [#allocation5], 4
      %s33 = int_to_ptr.vmem [resolvable:$true] %s32
      %38 = dma.hbm_to_vmem [thread:$0]  %s31, 256, %s33, [#allocation6], 64, 64, 4
    $region9: #{tpu_custom_call.1} parent=1 // pred_fallthru
      _
    // Predicated region
    $region10: #{tpu_custom_call.1} parent=1 // pred_check
      _
    $region11: #{tpu_custom_call.1} parent=1 // pred_check_branch
      %40 = sbr.rel (0) target = $region13
    $region12: #{tpu_custom_call.1} parent=1 // pred_region
      _
    $region13: #{tpu_custom_call.1} parent=1 // pred_fallthru
      _
    // Predicated region
    $region14: #{tpu_custom_call.1} parent=1 // pred_check
      _
    $region15: #{tpu_custom_call.1} parent=1 // pred_check_branch
      %42 = sbr.rel (0) target = $region17
    $region16: #{tpu_custom_call.1} parent=1 // pred_region
      %44 = vsyncadd [#allocation6], 0
      %s45 = sshll.u32 %s3, 4
      %s46 = int_to_ptr.hbm [resolvable:$true] %s45
      %s47 = sshll.u32 [#allocation7], 4
      %s48 = int_to_ptr.vmem [resolvable:$true] %s47
      %53 = dma.hbm_to_vmem [thread:$0]  %s46, 256, %s48, [#allocation6], 64, 64, 4
    $region17: #{tpu_custom_call.1} parent=1 // pred_fallthru
      _
    // Predicated region
    $region18: #{tpu_custom_call.1} parent=1 // pred_check
      _
    $region19: #{tpu_custom_call.1} parent=1 // pred_check_branch
      %55 = sbr.rel (0) target = $region21
    $region20: #{tpu_custom_call.1} parent=1 // pred_region
      _
    $region21: #{tpu_custom_call.1} parent=1 // pred_fallthru
      _
    // Predicated region
    $region22: #{tpu_custom_call.1} parent=1 // pred_check
      _
    $region23: #{tpu_custom_call.1} parent=1 // pred_check_branch
      %57 = sbr.rel (0) target = $region25
    $region24: #{tpu_custom_call.1} parent=1 // pred_region
      %59 = dma.done [#allocation3], 256
    $region25: #{tpu_custom_call.1} parent=1 // pred_fallthru
      _
    // Predicated region
    $region26: #{tpu_custom_call.1} parent=1 // pred_check
      _
    $region27: #{tpu_custom_call.1} parent=1 // pred_check_branch
      %61 = sbr.rel (0) target = $region29
    $region28: #{tpu_custom_call.1} parent=1 // pred_region
      %63 = dma.done [#allocation6], 256
    $region29: #{tpu_custom_call.1} parent=1 // pred_fallthru
      _
    // Predicated region
    $region30: #{tpu_custom_call.1} parent=1 // pred_check
      _
    $region31: #{tpu_custom_call.1} parent=1 // pred_check_branch
      %65 = sbr.rel (0) target = $region33
    $region32: #{tpu_custom_call.1} parent=1 // pred_region
      %67 = dma.done [#allocation6], 256
    $region33: #{tpu_custom_call.1} parent=1 // pred_fallthru
      _
    %v69 = vld [vmem:[#allocation2] sm:$0xff]
    %v70 = vld [vmem:[#allocation2 + $0x8] sm:$0xff]
    %v71 = vpack.c.bf16 %v70, %v69
    %v72 = vld [vmem:[#allocation5] sm:$0xf]
    %v73 = vld [vmem:[#allocation5 + $0x4] sm:$0xf]
    %v74 = vld [vmem:[#allocation5 + $0x8] sm:$0xf]
    %v75 = vld [vmem:[#allocation5 + $0xc] sm:$0xf]
    %v76 = vld [vmem:[%s2] sm:$0x1]
    %v78 = vperm.slane %v76, 0
    %v84 = vunpack.c.l.b16 %v72
    %v85 = vunpack.c.l.b16 %v73
    %v86 = vunpack.c.l.b16 %v74
    %v87 = vunpack.c.l.b16 %v75
    %v88 = vpack.c.b16 %v85, %v84
    %v89 = vpack.c.b16 %v87, %v86
    %vm92 = vcmask 261120
    %v94 = vsel %vm92, %v71, 0
    %96 = vmatpush.bf16.msra.mxu0 0
    %97 = vmatpush.bf16.msra.mxu0 0
    %98 = vmatpush.bf16.msra.mxu0 0
    %99 = vmatpush.bf16.msra.mxu0 0
    %100 = vmatpush.bf16.msra.mxu0 0
    %101 = vmatpush.bf16.msra.mxu0 0
    %102 = vmatpush.bf16.msra.mxu0 %v89
    %103 = vmatpush.bf16.msra.mxu0 %v88
    %104 = vmatmul.bf16.gmra.mxu0 %v94
    %v105 = vpop.f32.mrf.mxu0
    %v106 = vadd.f32 %v78, %v105
    %v107 = vpop.f32.mrf.mxu0
    %v108 = vadd.f32 %v78, %v107
    %109 = vdwg.mxu0
    %v110 = vtanh.pop %v106
    %v111 = vtanh.pop %v108
    %v112 = vpack.c.bf16 %v111, %v110
    %v113 = vld [vmem:[#allocation7] sm:$0xf]
    %v114 = vld [vmem:[#allocation7 + $0x4] sm:$0xf]
    %v115 = vld [vmem:[#allocation7 + $0x8] sm:$0xf]
    %v116 = vld [vmem:[#allocation7 + $0xc] sm:$0xf]
    %v117 = vld [vmem:[%s4] sm:$0x1]
    %v119 = vperm.slane %v117, 0
    %v125 = vunpack.c.l.b16 %v113
    %v126 = vunpack.c.l.b16 %v114
    %v127 = vunpack.c.l.b16 %v115
    %v128 = vunpack.c.l.b16 %v116
    %v129 = vpack.c.b16 %v126, %v125
    %v130 = vpack.c.b16 %v128, %v127
    %v134 = vsel %vm92, %v112, 0
    %136 = vmatpush.bf16.msra.mxu0 0
    %137 = vmatpush.bf16.msra.mxu0 0
    %138 = vmatpush.bf16.msra.mxu0 0
    %139 = vmatpush.bf16.msra.mxu0 0
    %140 = vmatpush.bf16.msra.mxu0 0
    %141 = vmatpush.bf16.msra.mxu0 0
    %142 = vmatpush.bf16.msra.mxu0 %v130
    %143 = vmatpush.bf16.msra.mxu0 %v129
    %144 = vmatmul.bf16.gmra.mxu0 %v134
    %v145 = vpop.f32.mrf.mxu0
    %v146 = vadd.f32 %v119, %v145
    %v147 = vpop.f32.mrf.mxu0
    %v148 = vadd.f32 %v119, %v147
    %149 = vdwg.mxu0
    %v150 = vpack.c.bf16 %v146, %v146
    %v151 = vpack.c.bf16 %v148, %v148
    %152 = vst [vmem:[#allocation8] sm:$0xf] %v150
    %153 = vst [vmem:[#allocation8 + $0x4] sm:$0xf] %v151
    // Predicated region
    $region34: #{tpu_custom_call.1} parent=1 // pred_check
      _
    $region35: #{tpu_custom_call.1} parent=1 // pred_check_branch
      %155 = sbr.rel (0) target = $region37
    $region36: #{tpu_custom_call.1} parent=1 // pred_region
      %157 = vsyncadd [#allocation4], 0
      %s158 = sshll.u32 [#allocation8], 4
      %s159 = int_to_ptr.vmem [resolvable:$true] %s158
      %s160 = sshll.u32 %s5, 4
      %s161 = int_to_ptr.hbm [resolvable:$true] %s160
      %166 = dma.vmem_to_hbm [thread:$0]  %s159, 128, %s161, [#allocation4], 64, 64, 4
    $region37: #{tpu_custom_call.1} parent=1 // pred_fallthru
      _
    // Predicated region
    $region38: #{tpu_custom_call.1} parent=1 // pred_check
      _
    $region39: #{tpu_custom_call.1} parent=1 // pred_check_branch
      %168 = sbr.rel (0) target = $region41
    $region40: #{tpu_custom_call.1} parent=1 // pred_region
      %170 = dma.done [#allocation4], 128
    $region41: #{tpu_custom_call.1} parent=1 // pred_fallthru
      _
    %171 = vsyncpa [#allocation3], 1
    %172 = vsyncpa [#allocation6], 1
    %173 = vsyncpa [#allocation4], 1

</llo_original>
